<compile_context>
chip_gen: v5e
topology: v5e:2x2
jax: 0.10.0
libtpu: 0.0.40
codegen_flags: <defaults>
</compile_context>

<pallas_src>
import jax
import jax.numpy as jnp
from jax import lax
from jax.experimental import pallas as pl
from jax.experimental.pallas import tpu as pltpu


# ------------------------------ Fused kernel --------------------------------
def _cbam_kernel(x_ref, w1_ref, w2_ref, kmat_ref, y_ref):
    # x_ref   : (Bb, C, HW) lane-dense view of Bb images
    # w1_ref  : (Ch, C)     fc1 weight ; w2_ref: (C, Ch) fc2 weight
    # kmat_ref: (2*HW, HW)  dense conv matrix for the stacked [mean, max] planes
    # y_ref   : (Bb, C, HW)
    x = x_ref[...].astype(jnp.float32)                     # (Bb, C, HW)
    w1 = w1_ref[...]                                       # (Ch, C)
    w2 = w2_ref[...]                                       # (C, Ch)

    # ---------------- Channel attention (VPU: dims are tiny) ----------------
    avg_c = jnp.mean(x, axis=2)                            # (Bb, C)
    max_c = jnp.max(x, axis=2)                             # (Bb, C)

    def mlp(p):                                            # p: (Bb, C)
        # h[b, j] = relu(sum_c w1[j, c] * p[b, c])
        h = jnp.maximum(
            jnp.sum(p[:, None, :] * w1[None, :, :], axis=-1), 0.0)   # (Bb, Ch)
        # o[b, c] = sum_j w2[c, j] * h[b, j]
        return jnp.sum(h[:, None, :] * w2[None, :, :], axis=-1)      # (Bb, C)

    ca = jax.nn.sigmoid(mlp(avg_c) + mlp(max_c))           # (Bb, C)
    x1 = x * ca[:, :, None]                                # (Bb, C, HW)

    # ---------------- Spatial attention ----------------
    mean_p = jnp.mean(x1, axis=1)                          # (Bb, HW)
    max_p = jnp.max(x1, axis=1)                            # (Bb, HW)
    planes = jnp.concatenate([mean_p, max_p], axis=1)      # (Bb, 2*HW)

    # 7x7 zero-padded "same" conv as ONE MXU matmul (padding baked into kmat).
    conv = jnp.dot(planes, kmat_ref[...],
                   preferred_element_type=jnp.float32)     # (Bb, HW)
    sa = jax.nn.sigmoid(conv)                              # (Bb, HW)

    y_ref[...] = (x1 * sa[:, None, :]).astype(y_ref.dtype)


# ----------------------- Conv-matrix precomputation --------------------------
def build_spatial_conv_matrix(wsp, H, W):
    """Dense (2*HW, HW) matrix reproducing Conv2d(2, 1, K, padding=K//2, bias=False).

    conv_flat = concat([mean_plane, max_plane], -1) @ kmat.
    Depends only on (wsp, H, W): build once per set of weights and reuse.
    """
    K = wsp.shape[-1]
    pad = (K - 1) // 2
    HW = H * W
    idx = jnp.arange(HW)
    hi, wi = idx // W, idx % W
    dy = hi[:, None] - hi[None, :] + pad                   # (HW, HW), i -> j
    dx = wi[:, None] - wi[None, :] + pad
    valid = (dy >= 0) & (dy < K) & (dx >= 0) & (dx < K)
    km = jnp.where(
        valid[None, :, :],
        wsp[:, jnp.clip(dy, 0, K - 1), jnp.clip(dx, 0, K - 1)],
        0.0)                                               # (2, HW, HW)
    return km.reshape(2 * HW, HW).astype(jnp.float32)


# ------------------------------- Wrapper -------------------------------------
def cbam_block(x, w1, w2, wsp, *, kmat=None, batch_blocks=1):
    """x: (B, C, H, W) f32; w1: (C//ratio, C); w2: (C, C//ratio); wsp: (2, K, K).

    batch_blocks=1 (default) processes the whole batch in a single grid step
    (best on single-TC v5e/v6e at these sizes); use batch_blocks=2 on v7x so
    each TensorCore gets one step.
    """
    B, C, H, W = x.shape
    Ch = w1.shape[0]
    HW = H * W
    assert B % batch_blocks == 0
    bblk = B // batch_blocks

    if kmat is None:
        kmat = build_spatial_conv_matrix(wsp, H, W)        # (2*HW, HW)

    x2 = x.reshape(B, C, HW)                               # lane-dense view

    # Advisory cost hint for XLA's scheduler around the custom call.
    flops = 2 * B * (2 * HW) * HW + 8 * B * C * Ch + 8 * B * C * HW
    transcendentals = B * (C + HW)
    bytes_accessed = 4 * (2 * B * C * HW + 2 * HW * HW + 2 * C * Ch)

    y2 = pl.pallas_call(
        _cbam_kernel,
        out_shape=jax.ShapeDtypeStruct((B, C, HW), x.dtype),
        grid=(batch_blocks,),
        in_specs=[
            pl.BlockSpec((bblk, C, HW), lambda b: (b, 0, 0)),
            # Grid-invariant operands (constant index_map); at larger HW,
            # single-buffer kmat (pipeline_mode) or DMA it once into scratch.
            pl.BlockSpec((Ch, C), lambda b: (0, 0)),
            pl.BlockSpec((C, Ch), lambda b: (0, 0)),
            pl.BlockSpec((2 * HW, HW), lambda b: (0, 0)),
        ],
        out_specs=pl.BlockSpec((bblk, C, HW), lambda b: (b, 0, 0)),
        compiler_params=pltpu.CompilerParams(
            dimension_semantics=("parallel",)),
        cost_estimate=pl.CostEstimate(
            flops=flops,
            transcendentals=transcendentals,
            bytes_accessed=bytes_accessed),
    )(x2, w1.astype(jnp.float32), w2.astype(jnp.float32), kmat)

    return y2.reshape(B, C, H, W)


# --------------------------- Pure-JAX reference ------------------------------
def cbam_reference(x, w1, w2, wsp):
    hp = lax.Precision.HIGHEST
    avg = jnp.mean(x, axis=(2, 3), keepdims=True)
    mx = jnp.max(x, axis=(2, 3), keepdims=True)

    def mlp(p):
        h = jax.nn.relu(jnp.einsum("hc,bcij->bhij", w1, p, precision=hp))
        return jnp.einsum("ch,bhij->bcij", w2, h, precision=hp)

    ca = jax.nn.sigmoid(mlp(avg) + mlp(mx))
    x1 = x * ca
    sp = jnp.concatenate([jnp.mean(x1, axis=1, keepdims=True),
                          jnp.max(x1, axis=1, keepdims=True)], axis=1)
    pad = (wsp.shape[-1] - 1) // 2
    conv = lax.conv_general_dilated(
        sp, wsp[None], window_strides=(1, 1), padding=((pad, pad), (pad, pad)),
        dimension_numbers=("NCHW", "OIHW", "NCHW"), precision=hp)
    return x1 * jax.nn.sigmoid(conv)


if __name__ == "__main__":
    B, C, H, W = 2, 16, 16, 16
    ratio, ksize = 8, 7
    Ch = C // ratio

    key = jax.random.PRNGKey(0)
    kx, k1, k2, k3 = jax.random.split(key, 4)

    x = jax.random.normal(kx, (B, C, H, W), dtype=jnp.float32)
    # Conv2d 1x1 weights (out, in) and the 7x7 spatial conv weight (in=2, 7, 7),
    # bias=False as in the PyTorch module.
    w1 = jax.random.normal(k1, (Ch, C), dtype=jnp.float32) * (1.0 / jnp.sqrt(C))
    w2 = jax.random.normal(k2, (C, Ch), dtype=jnp.float32) * (1.0 / jnp.sqrt(Ch))
    wsp = jax.random.normal(k3, (2, ksize, ksize), dtype=jnp.float32) * (
        1.0 / jnp.sqrt(2.0 * ksize * ksize))

    # kmat depends only on (wsp, H, W): precompute once, reuse across calls.
    kmat = jax.block_until_ready(build_spatial_conv_matrix(wsp, H, W))

    y = jax.block_until_ready(cbam_block(x, w1, w2, wsp, kmat=kmat))
    y_ref = jax.block_until_ready(cbam_reference(x, w1, w2, wsp))

    assert y.shape == (B, C, H, W)
    assert jnp.allclose(y, y_ref, rtol=1e-4, atol=1e-4), (
        float(jnp.max(jnp.abs(y - y_ref))))
    print("KERNEL_OK")
</pallas_src>

<mosaic_0001>
module attributes {stable_mosaic.version = 11 : i64} {
  func.func @_cbam_kernel(%arg0: i32, %arg1: memref<2x16x256xf32, #tpu.memory_space<vmem>>, %arg2: memref<2x16xf32, #tpu.memory_space<vmem>>, %arg3: memref<16x2xf32, #tpu.memory_space<vmem>>, %arg4: memref<512x256xf32, #tpu.memory_space<vmem>>, %arg5: memref<2x16x256xf32, #tpu.memory_space<vmem>>) attributes {dimension_semantics = [#tpu.dimension_semantics<parallel>], iteration_bounds = array<i64: 1>, scalar_prefetch = 0 : i64, scratch_operands = 0 : i64, tpu.core_type = #tpu.core_type<tc>, window_params = [{transform_indices = @transform_0, window_bounds = array<i64: 2, 16, 256>}, {pipeline_mode = #tpu.pipeline_mode<synchronous>, transform_indices = @transform_1, window_bounds = array<i64: 2, 16>}, {pipeline_mode = #tpu.pipeline_mode<synchronous>, transform_indices = @transform_2, window_bounds = array<i64: 16, 2>}, {pipeline_mode = #tpu.pipeline_mode<synchronous>, transform_indices = @transform_3, window_bounds = array<i64: 512, 256>}, {transform_indices = @transform_4, window_bounds = array<i64: 2, 16, 256>}]} {
    %c0 = arith.constant 0 : index
    %c0_0 = arith.constant 0 : index
    %c0_1 = arith.constant 0 : index
    %0 = vector.load %arg1[%c0, %c0_0, %c0_1] : memref<2x16x256xf32, #tpu.memory_space<vmem>>, vector<2x16x256xf32>
    %c0_2 = arith.constant 0 : index
    %c0_3 = arith.constant 0 : index
    %1 = vector.load %arg2[%c0_2, %c0_3] : memref<2x16xf32, #tpu.memory_space<vmem>>, vector<2x16xf32>
    %c0_4 = arith.constant 0 : index
    %c0_5 = arith.constant 0 : index
    %2 = vector.load %arg3[%c0_4, %c0_5] : memref<16x2xf32, #tpu.memory_space<vmem>>, vector<16x2xf32>
    %cst = arith.constant dense<0.000000e+00> : vector<2x16xf32>
    %3 = vector.multi_reduction <add>, %0, %cst [2] : vector<2x16x256xf32> to vector<2x16xf32>
    %cst_6 = arith.constant 2.560000e+02 : f32
    %4 = vector.broadcast %cst_6 : f32 to vector<2x16xf32>
    %5 = arith.divf %3, %4 : vector<2x16xf32>
    %cst_7 = arith.constant dense<0xFF800000> : vector<2x16xf32>
    %6 = vector.multi_reduction <maximumf>, %0, %cst_7 [2] : vector<2x16x256xf32> to vector<2x16xf32>
    %7 = vector.shape_cast %5 : vector<2x16xf32> to vector<2x1x16xf32>
    %8 = vector.shape_cast %1 : vector<2x16xf32> to vector<1x2x16xf32>
    %9 = vector.broadcast %7 : vector<2x1x16xf32> to vector<2x2x16xf32>
    %10 = vector.broadcast %8 : vector<1x2x16xf32> to vector<2x2x16xf32>
    %11 = arith.mulf %9, %10 : vector<2x2x16xf32>
    %cst_8 = arith.constant dense<0.000000e+00> : vector<2x2xf32>
    %12 = vector.multi_reduction <add>, %11, %cst_8 [2] : vector<2x2x16xf32> to vector<2x2xf32>
    %cst_9 = arith.constant 0.000000e+00 : f32
    %13 = vector.broadcast %cst_9 : f32 to vector<2x2xf32>
    %14 = arith.maximumf %12, %13 : vector<2x2xf32>
    %15 = vector.shape_cast %14 : vector<2x2xf32> to vector<2x1x2xf32>
    %16 = vector.shape_cast %2 : vector<16x2xf32> to vector<1x16x2xf32>
    %17 = vector.broadcast %15 : vector<2x1x2xf32> to vector<2x16x2xf32>
    %18 = vector.broadcast %16 : vector<1x16x2xf32> to vector<2x16x2xf32>
    %19 = arith.mulf %17, %18 : vector<2x16x2xf32>
    %cst_10 = arith.constant dense<0.000000e+00> : vector<2x16xf32>
    %20 = vector.multi_reduction <add>, %19, %cst_10 [2] : vector<2x16x2xf32> to vector<2x16xf32>
    %21 = vector.shape_cast %6 : vector<2x16xf32> to vector<2x1x16xf32>
    %22 = vector.shape_cast %1 : vector<2x16xf32> to vector<1x2x16xf32>
    %23 = vector.broadcast %21 : vector<2x1x16xf32> to vector<2x2x16xf32>
    %24 = vector.broadcast %22 : vector<1x2x16xf32> to vector<2x2x16xf32>
    %25 = arith.mulf %23, %24 : vector<2x2x16xf32>
    %cst_11 = arith.constant dense<0.000000e+00> : vector<2x2xf32>
    %26 = vector.multi_reduction <add>, %25, %cst_11 [2] : vector<2x2x16xf32> to vector<2x2xf32>
    %cst_12 = arith.constant 0.000000e+00 : f32
    %27 = vector.broadcast %cst_12 : f32 to vector<2x2xf32>
    %28 = arith.maximumf %26, %27 : vector<2x2xf32>
    %29 = vector.shape_cast %28 : vector<2x2xf32> to vector<2x1x2xf32>
    %30 = vector.shape_cast %2 : vector<16x2xf32> to vector<1x16x2xf32>
    %31 = vector.broadcast %29 : vector<2x1x2xf32> to vector<2x16x2xf32>
    %32 = vector.broadcast %30 : vector<1x16x2xf32> to vector<2x16x2xf32>
    %33 = arith.mulf %31, %32 : vector<2x16x2xf32>
    %cst_13 = arith.constant dense<0.000000e+00> : vector<2x16xf32>
    %34 = vector.multi_reduction <add>, %33, %cst_13 [2] : vector<2x16x2xf32> to vector<2x16xf32>
    %35 = arith.addf %20, %34 : vector<2x16xf32>
    %36 = arith.negf %35 : vector<2x16xf32>
    %37 = math.exp %36 : vector<2x16xf32>
    %cst_14 = arith.constant 1.000000e+00 : f32
    %38 = vector.broadcast %cst_14 : f32 to vector<2x16xf32>
    %39 = arith.addf %38, %37 : vector<2x16xf32>
    %40 = arith.divf %38, %39 : vector<2x16xf32>
    %41 = vector.shape_cast %40 : vector<2x16xf32> to vector<2x16x1xf32>
    %42 = vector.broadcast %41 : vector<2x16x1xf32> to vector<2x16x256xf32>
    %43 = arith.mulf %0, %42 : vector<2x16x256xf32>
    %cst_15 = arith.constant dense<0.000000e+00> : vector<2x256xf32>
    %44 = vector.multi_reduction <add>, %43, %cst_15 [1] : vector<2x16x256xf32> to vector<2x256xf32>
    %cst_16 = arith.constant 1.600000e+01 : f32
    %45 = vector.broadcast %cst_16 : f32 to vector<2x256xf32>
    %46 = arith.divf %44, %45 : vector<2x256xf32>
    %cst_17 = arith.constant dense<0xFF800000> : vector<2x256xf32>
    %47 = vector.multi_reduction <maximumf>, %43, %cst_17 [1] : vector<2x16x256xf32> to vector<2x256xf32>
    %48 = tpu.concatenate %46, %47 in 1 : vector<2x256xf32>, vector<2x256xf32> -> vector<2x512xf32>
    %c0_18 = arith.constant 0 : index
    %c0_19 = arith.constant 0 : index
    %49 = vector.load %arg4[%c0_18, %c0_19] : memref<512x256xf32, #tpu.memory_space<vmem>>, vector<512x256xf32>
    %cst_20 = arith.constant dense<0.000000e+00> : vector<2x256xf32>
    %50 = tpu.matmul %48, %49, %cst_20 {dimension_numbers = #tpu.dot_dimension_numbers<[1], [0], [0], [1], [0, 0, 1, 1], [], []>} : vector<2x512xf32>, vector<512x256xf32>, vector<2x256xf32> -> vector<2x256xf32>
    %51 = arith.negf %50 : vector<2x256xf32>
    %52 = math.exp %51 : vector<2x256xf32>
    %cst_21 = arith.constant 1.000000e+00 : f32
    %53 = vector.broadcast %cst_21 : f32 to vector<2x256xf32>
    %54 = arith.addf %53, %52 : vector<2x256xf32>
    %55 = arith.divf %53, %54 : vector<2x256xf32>
    %56 = vector.shape_cast %55 : vector<2x256xf32> to vector<2x1x256xf32>
    %57 = vector.broadcast %56 : vector<2x1x256xf32> to vector<2x16x256xf32>
    %58 = arith.mulf %43, %57 : vector<2x16x256xf32>
    %c0_22 = arith.constant 0 : index
    %c0_23 = arith.constant 0 : index
    %c0_24 = arith.constant 0 : index
    %59 = vector.load %arg5[%c0_22, %c0_23, %c0_24] : memref<2x16x256xf32, #tpu.memory_space<vmem>>, vector<2x16x256xf32>
    tpu.vector_store %arg5[%c0_22, %c0_23, %c0_24], %58 {strides = array<i32>} : memref<2x16x256xf32, #tpu.memory_space<vmem>>, vector<2x16x256xf32>,
    return
  }
  func.func @transform_0(%arg0: i32) -> (i32, i32, i32) {
    %c0_i32 = arith.constant 0 : i32
    %c0_i32_0 = arith.constant 0 : i32
    %c0_i32_1 = arith.constant 0 : i32
    return %arg0, %c0_i32, %c0_i32_0 : i32, i32, i32
  }
  func.func @transform_1(%arg0: i32) -> (i32, i32) {
    %c0_i32 = arith.constant 0 : i32
    %c0_i32_0 = arith.constant 0 : i32
    %c0_i32_1 = arith.constant 0 : i32
    return %c0_i32, %c0_i32_0 : i32, i32
  }
  func.func @transform_2(%arg0: i32) -> (i32, i32) {
    %c0_i32 = arith.constant 0 : i32
    %c0_i32_0 = arith.constant 0 : i32
    %c0_i32_1 = arith.constant 0 : i32
    return %c0_i32, %c0_i32_0 : i32, i32
  }
  func.func @transform_3(%arg0: i32) -> (i32, i32) {
    %c0_i32 = arith.constant 0 : i32
    %c0_i32_0 = arith.constant 0 : i32
    %c0_i32_1 = arith.constant 0 : i32
    return %c0_i32, %c0_i32_0 : i32, i32
  }
  func.func @transform_4(%arg0: i32) -> (i32, i32, i32) {
    %c0_i32 = arith.constant 0 : i32
    %c0_i32_0 = arith.constant 0 : i32
    %c0_i32_1 = arith.constant 0 : i32
    return %arg0, %c0_i32, %c0_i32_0 : i32, i32, i32
  }
}

</mosaic_0001>

<llo_original>
// kernel: tpu_custom_call.1
$region0: #{tpu_custom_call.1}
  #allocation0 [shape = 'u32[]', space=smem, size = 0x4, offset = 0x4, fixed_abs, tag = 'smem constant byte address 0x4 - core index']
  #allocation1 [shape = 'u32[72,128]{1,0:T(1,128)}', space=vmem, size = 0x9000, scoped, tag = 'internal scratch']
  %s0 = inlined_call_operand.hbm [shape: f32[2,16,256], index: 0, kind: input, shape index: {}]
  %s1 = inlined_call_operand.vmem [shape: f32[2,16], index: 1, kind: input, shape index: {}]
  %s2 = inlined_call_operand.vmem [shape: f32[16,2], index: 2, kind: input, shape index: {}]
  %s3 = inlined_call_operand.hbm [shape: f32[512,256], index: 3, kind: input, shape index: {}]
  %s4 = inlined_call_operand.hbm [shape: f32[2,16,256], index: 4, kind: output, shape index: {}]
  %s5 = sld [smem:[#allocation0]]
  $region34: #{tpu_custom_call.1} parent=0
    _
  %s7 = ssub.s32 1, %s5
  %s8 = scalar_select 0, %s7, %s5
  $region1: #{tpu_custom_call.1} parent=0
    #allocation2 [shape = 'u8[32768]{0}', space=vmem, size = 0x8000, scoped, tag = 'input window, operand 0, single buffered']
    #allocation3 [shape = 's32[1]{0}', space=sflag, size = 0x4, scoped, tag = 'scoped memory for tpu_custom_call.1']
    #allocation4 [shape = 's32[1]{0}', space=sflag, size = 0x4, scoped, tag = 'scoped memory for tpu_custom_call.1']
    #allocation5 [shape = 'u8[524288]{0}', space=vmem, size = 0x80000, scoped, tag = 'input window, operand 3, single buffered']
    #allocation6 [shape = 's32[1]{0}', space=sflag, size = 0x4, scoped, tag = 'scoped memory for tpu_custom_call.1']
    #allocation7 [shape = 'u8[32768]{0}', space=vmem, size = 0x8000, scoped, tag = 'output window, operand 0, single buffered']
    %9 = vsyncpa [#allocation3], 0
    %10 = vsyncpa [#allocation6], 0
    %11 = vsyncpa [#allocation4], 0
    // Predicated region
    $region2: #{tpu_custom_call.1} parent=1 // pred_check
      _
    $region3: #{tpu_custom_call.1} parent=1 // pred_check_branch
      %13 = sbr.rel (0) target = $region5
    $region4: #{tpu_custom_call.1} parent=1 // pred_region
      %15 = vsyncadd [#allocation3], 0
      %s16 = sshll.u32 %s0, 4
      %s17 = int_to_ptr.hbm [resolvable:$true] %s16
      %s18 = sshll.u32 [#allocation2], 4
      %s19 = int_to_ptr.vmem [resolvable:$true] %s18
      %24 = dma.hbm_to_vmem [thread:$0]  %s17, 1024, %s19, [#allocation3], 256, 256, 16
    $region5: #{tpu_custom_call.1} parent=1 // pred_fallthru
      _
    // Predicated region
    $region6: #{tpu_custom_call.1} parent=1 // pred_check
      _
    $region7: #{tpu_custom_call.1} parent=1 // pred_check_branch
      %26 = sbr.rel (0) target = $region9
    $region8: #{tpu_custom_call.1} parent=1 // pred_region
      _
    $region9: #{tpu_custom_call.1} parent=1 // pred_fallthru
      _
    // Predicated region
    $region10: #{tpu_custom_call.1} parent=1 // pred_check
      _
    $region11: #{tpu_custom_call.1} parent=1 // pred_check_branch
      %28 = sbr.rel (0) target = $region13
    $region12: #{tpu_custom_call.1} parent=1 // pred_region
      _
    $region13: #{tpu_custom_call.1} parent=1 // pred_fallthru
      _
    // Predicated region
    $region14: #{tpu_custom_call.1} parent=1 // pred_check
      _
    $region15: #{tpu_custom_call.1} parent=1 // pred_check_branch
      %30 = sbr.rel (0) target = $region17
    $region16: #{tpu_custom_call.1} parent=1 // pred_region
      %32 = vsyncadd [#allocation6], 0
      %s33 = sshll.u32 %s3, 4
      %s34 = int_to_ptr.hbm [resolvable:$true] %s33
      %s35 = sshll.u32 [#allocation5], 4
      %s36 = int_to_ptr.vmem [resolvable:$true] %s35
      %41 = dma.hbm_to_vmem [thread:$0]  %s34, 16384, %s36, [#allocation6], 256, 256, 16
    $region17: #{tpu_custom_call.1} parent=1 // pred_fallthru
      _
    // Predicated region
    $region18: #{tpu_custom_call.1} parent=1 // pred_check
      _
    $region19: #{tpu_custom_call.1} parent=1 // pred_check_branch
      %43 = sbr.rel (0) target = $region21
    $region20: #{tpu_custom_call.1} parent=1 // pred_region
      %45 = dma.done [#allocation3], 1024
    $region21: #{tpu_custom_call.1} parent=1 // pred_fallthru
      _
    // Predicated region
    $region22: #{tpu_custom_call.1} parent=1 // pred_check
      _
    $region23: #{tpu_custom_call.1} parent=1 // pred_check_branch
      %47 = sbr.rel (0) target = $region25
    $region24: #{tpu_custom_call.1} parent=1 // pred_region
      %49 = dma.done [#allocation6], 16384
    $region25: #{tpu_custom_call.1} parent=1 // pred_fallthru
      _
    %v50 = vld [vmem:[#allocation2] sm:$0xff]
    %v51 = vld [vmem:[#allocation2 + $0x8] sm:$0xff]
    %v52 = vld [vmem:[#allocation2 + $0x10] sm:$0xff]
    %v53 = vld [vmem:[#allocation2 + $0x18] sm:$0xff]
    %v54 = vld [vmem:[#allocation2 + $0x20] sm:$0xff]
    %v55 = vld [vmem:[#allocation2 + $0x28] sm:$0xff]
    %v56 = vld [vmem:[#allocation2 + $0x30] sm:$0xff]
    %v57 = vld [vmem:[#allocation2 + $0x38] sm:$0xff]
    %v58 = vld [vmem:[%s1] sm:$0x3]
    %v59 = vld [vmem:[%s2] sm:$0xff]
    %v60 = vld [vmem:[%s2 + $0x8] sm:$0xff]
    %v61 = vadd.f32 %v50, %v51
    %62 = vadd.xlane.f32.xlu0 %v61
    %v63 = vpop.xlane.xlu0 %62
    %v64 = vadd.f32 %v52, %v53
    %65 = vadd.xlane.f32.xlu0 %v64
    %v66 = vpop.xlane.xlu0 %65
    %v67 = vadd.f32 %v54, %v55
    %68 = vadd.xlane.f32.xlu0 %v67
    %v69 = vpop.xlane.xlu0 %68
    %v70 = vadd.f32 %v56, %v57
    %71 = vadd.xlane.f32.xlu0 %v70
    %v72 = vpop.xlane.xlu0 %71
    %v73 = vrcp.pop 256.0
    %v74 = vmul.f32 256.0, %v73
    %v75 = vsub.f32 1.0, %v74
    %v76 = vmul.f32 %v73, %v75
    %v77 = vadd.f32 %v73, %v76
    %vm78 = vweird.f32 %v73
    %v79 = vsel %vm78, %v73, %v77
    %v80 = vmul.f32 %v63, %v79
    %v81 = vmul.f32 %v66, %v79
    %v82 = vmul.f32 %v69, %v79
    %v83 = vmul.f32 %v72, %v79
    %v84 = vmax.f32 %v50, %v51
    %85 = vmax.xlane.f32.xlu0 %v84
    %v86 = vpop.xlane.xlu0 %85
    %v87 = vmax.f32 %v52, %v53
    %88 = vmax.xlane.f32.xlu0 %v87
    %v89 = vpop.xlane.xlu0 %88
    %v90 = vmax.f32 %v54, %v55
    %91 = vmax.xlane.f32.xlu0 %v90
    %v92 = vpop.xlane.xlu0 %91
    %v93 = vmax.f32 %v56, %v57
    %94 = vmax.xlane.f32.xlu0 %v93
    %v95 = vpop.xlane.xlu0 %94
    %v97 = vperm.slane %v58, 0
    %v98 = vlaneseq
    %v99 = vshrl.u32 %v98, 7
    %101 = vset.pattern.permute.xlu0 %v99
    %102 = vperm.xlu0 %101, %v97
    %v103 = vpop.permute.xlu0 %102
    %v104 = vlaneseq
    %v105 = vshrl.u32 %v104, 7
    %v106 = vadd.s32 %v105, 8
    %107 = vset.pattern.permute.xlu0 %v106
    %108 = vperm.xlu0 %107, %v97
    %v109 = vpop.permute.xlu0 %108
    %v110 = vperm.slane %v58, 1
    %v111 = vlaneseq
    %v112 = vshrl.u32 %v111, 7
    %114 = vset.pattern.permute.xlu0 %v112
    %115 = vperm.xlu0 %114, %v110
    %v116 = vpop.permute.xlu0 %115
    %v117 = vlaneseq
    %v118 = vshrl.u32 %v117, 7
    %v119 = vadd.s32 %v118, 8
    %120 = vset.pattern.permute.xlu0 %v119
    %121 = vperm.xlu0 %120, %v110
    %v122 = vpop.permute.xlu0 %121
    %v127 = vmul.f32 %v80, %v103
    %v128 = vmul.f32 %v81, %v109
    %v129 = vmul.f32 %v80, %v116
    %v130 = vmul.f32 %v81, %v122
    %v131 = vmul.f32 %v82, %v103
    %v132 = vmul.f32 %v83, %v109
    %v133 = vmul.f32 %v82, %v116
    %v134 = vmul.f32 %v83, %v122
    %143 = vset.pattern.permute.xlu0 0
    %144 = vperm.xlu0 %143, %v127
    %v145 = vpop.permute.xlu0 %144
    %146 = vset.pattern.permute.xlu0 0
    %147 = vperm.xlu0 %146, %v128
    %v148 = vpop.permute.xlu0 %147
    %149 = vset.pattern.permute.xlu0 0
    %150 = vperm.xlu0 %149, %v129
    %v151 = vpop.permute.xlu0 %150
    %152 = vset.pattern.permute.xlu0 0
    %153 = vperm.xlu0 %152, %v130
    %v154 = vpop.permute.xlu0 %153
    %155 = vset.pattern.permute.xlu0 0
    %156 = vperm.xlu0 %155, %v131
    %v157 = vpop.permute.xlu0 %156
    %158 = vset.pattern.permute.xlu0 0
    %159 = vperm.xlu0 %158, %v132
    %v160 = vpop.permute.xlu0 %159
    %161 = vset.pattern.permute.xlu0 0
    %162 = vperm.xlu0 %161, %v133
    %v163 = vpop.permute.xlu0 %162
    %164 = vset.pattern.permute.xlu0 0
    %165 = vperm.xlu0 %164, %v134
    %v166 = vpop.permute.xlu0 %165
    %v167 = vlaneseq
    %v168 = vand.u32 %v167, 127
    %v169 = vperm.slane %v145, %v168
    %v170 = vadd.s32 %v168, 4294967288
    %v171 = vperm.slane %v148, %v170
    %vm172 = vcmask 130112
    %v173 = vsel %vm172, %v171, %v169
    %v174 = vperm.slane %v151, %v168
    %v175 = vperm.slane %v154, %v170
    %v176 = vsel %vm172, %v175, %v174
    %v177 = vperm.slane %v157, %v168
    %v178 = vperm.slane %v160, %v170
    %v179 = vsel %vm172, %v178, %v177
    %v180 = vperm.slane %v163, %v168
    %v181 = vperm.slane %v166, %v170
    %v182 = vsel %vm172, %v181, %v180
    %vm183 = vcmask 1041409
    %v184 = vsel %vm183, %v176, %v173
    %v185 = vsel %vm183, %v182, %v179
    %vm188 = vcmask 123904
    %v189 = vsel %vm188, %v184, 0.0
    %190 = vadd.xlane.f32.xlu0 %v189
    %v191 = vpop.xlane.xlu0 %190
    %v192 = vsel %vm188, %v185, 0.0
    %193 = vadd.xlane.f32.xlu0 %v192
    %v194 = vpop.xlane.xlu0 %193
    %v195 = vmax.f32 %v191, 0.0
    %v196 = vmax.f32 %v194, 0.0
    %v199 = vperm.slane %v59, 0
    %v200 = vlaneseq
    %v201 = vshrl.u32 %v200, 7
    %203 = vset.pattern.permute.xlu0 %v201
    %204 = vperm.xlu0 %203, %v199
    %v205 = vpop.permute.xlu0 %204
    %v206 = vperm.slane %v59, 1
    %v207 = vlaneseq
    %v208 = vshrl.u32 %v207, 7
    %210 = vset.pattern.permute.xlu0 %v208
    %211 = vperm.xlu0 %210, %v206
    %v212 = vpop.permute.xlu0 %211
    %v213 = vperm.slane %v59, 2
    %v214 = vlaneseq
    %v215 = vshrl.u32 %v214, 7
    %217 = vset.pattern.permute.xlu0 %v215
    %218 = vperm.xlu0 %217, %v213
    %v219 = vpop.permute.xlu0 %218
    %v220 = vperm.slane %v59, 3
    %v221 = vlaneseq
    %v222 = vshrl.u32 %v221, 7
    %224 = vset.pattern.permute.xlu0 %v222
    %225 = vperm.xlu0 %224, %v220
    %v226 = vpop.permute.xlu0 %225
    %v227 = vperm.slane %v59, 4
    %v228 = vlaneseq
    %v229 = vshrl.u32 %v228, 7
    %231 = vset.pattern.permute.xlu0 %v229
    %232 = vperm.xlu0 %231, %v227
    %v233 = vpop.permute.xlu0 %232
    %v234 = vperm.slane %v59, 5
    %v235 = vlaneseq
    %v236 = vshrl.u32 %v235, 7
    %238 = vset.pattern.permute.xlu0 %v236
    %239 = vperm.xlu0 %238, %v234
    %v240 = vpop.permute.xlu0 %239
    %v241 = vperm.slane %v59, 6
    %v242 = vlaneseq
    %v243 = vshrl.u32 %v242, 7
    %245 = vset.pattern.permute.xlu0 %v243
    %246 = vperm.xlu0 %245, %v241
    %v247 = vpop.permute.xlu0 %246
    %v248 = vperm.slane %v59, 7
    %v249 = vlaneseq
    %v250 = vshrl.u32 %v249, 7
    %252 = vset.pattern.permute.xlu0 %v250
    %253 = vperm.xlu0 %252, %v248
    %v254 = vpop.permute.xlu0 %253
    %v255 = vperm.slane %v60, 0
    %v256 = vlaneseq
    %v257 = vshrl.u32 %v256, 7
    %259 = vset.pattern.permute.xlu0 %v257
    %260 = vperm.xlu0 %259, %v255
    %v261 = vpop.permute.xlu0 %260
    %v262 = vperm.slane %v60, 1
    %v263 = vlaneseq
    %v264 = vshrl.u32 %v263, 7
    %266 = vset.pattern.permute.xlu0 %v264
    %267 = vperm.xlu0 %266, %v262
    %v268 = vpop.permute.xlu0 %267
    %v269 = vperm.slane %v60, 2
    %v270 = vlaneseq
    %v271 = vshrl.u32 %v270, 7
    %273 = vset.pattern.permute.xlu0 %v271
    %274 = vperm.xlu0 %273, %v269
    %v275 = vpop.permute.xlu0 %274
    %v276 = vperm.slane %v60, 3
    %v277 = vlaneseq
    %v278 = vshrl.u32 %v277, 7
    %280 = vset.pattern.permute.xlu0 %v278
    %281 = vperm.xlu0 %280, %v276
    %v282 = vpop.permute.xlu0 %281
    %v283 = vperm.slane %v60, 4
    %v284 = vlaneseq
    %v285 = vshrl.u32 %v284, 7
    %287 = vset.pattern.permute.xlu0 %v285
    %288 = vperm.xlu0 %287, %v283
    %v289 = vpop.permute.xlu0 %288
    %v290 = vperm.slane %v60, 5
    %v291 = vlaneseq
    %v292 = vshrl.u32 %v291, 7
    %294 = vset.pattern.permute.xlu0 %v292
    %295 = vperm.xlu0 %294, %v290
    %v296 = vpop.permute.xlu0 %295
    %v297 = vperm.slane %v60, 6
    %v298 = vlaneseq
    %v299 = vshrl.u32 %v298, 7
    %301 = vset.pattern.permute.xlu0 %v299
    %302 = vperm.xlu0 %301, %v297
    %v303 = vpop.permute.xlu0 %302
    %v304 = vperm.slane %v60, 7
    %v305 = vlaneseq
    %v306 = vshrl.u32 %v305, 7
    %308 = vset.pattern.permute.xlu0 %v306
    %309 = vperm.xlu0 %308, %v304
    %v310 = vpop.permute.xlu0 %309
    %v327 = vmul.f32 %v195, %v205
    %v328 = vmul.f32 %v195, %v212
    %v329 = vmul.f32 %v195, %v219
    %v330 = vmul.f32 %v195, %v226
    %v331 = vmul.f32 %v195, %v233
    %v332 = vmul.f32 %v195, %v240
    %v333 = vmul.f32 %v195, %v247
    %v334 = vmul.f32 %v195, %v254
    %v335 = vmul.f32 %v195, %v261
    %v336 = vmul.f32 %v195, %v268
    %v337 = vmul.f32 %v195, %v275
    %v338 = vmul.f32 %v195, %v282
    %v339 = vmul.f32 %v195, %v289
    %v340 = vmul.f32 %v195, %v296
    %v341 = vmul.f32 %v195, %v303
    %v342 = vmul.f32 %v195, %v310
    %v343 = vmul.f32 %v196, %v205
    %v344 = vmul.f32 %v196, %v212
    %v345 = vmul.f32 %v196, %v219
    %v346 = vmul.f32 %v196, %v226
    %v347 = vmul.f32 %v196, %v233
    %v348 = vmul.f32 %v196, %v240
    %v349 = vmul.f32 %v196, %v247
    %v350 = vmul.f32 %v196, %v254
    %v351 = vmul.f32 %v196, %v261
    %v352 = vmul.f32 %v196, %v268
    %v353 = vmul.f32 %v196, %v275
    %v354 = vmul.f32 %v196, %v282
    %v355 = vmul.f32 %v196, %v289
    %v356 = vmul.f32 %v196, %v296
    %v357 = vmul.f32 %v196, %v303
    %v358 = vmul.f32 %v196, %v310
    %391 = vset.pattern.permute.xlu0 0
    %392 = vperm.xlu0 %391, %v327
    %v393 = vpop.permute.xlu0 %392
    %394 = vset.pattern.permute.xlu0 0
    %395 = vperm.xlu0 %394, %v328
    %v396 = vpop.permute.xlu0 %395
    %397 = vset.pattern.permute.xlu0 0
    %398 = vperm.xlu0 %397, %v329
    %v399 = vpop.permute.xlu0 %398
    %400 = vset.pattern.permute.xlu0 0
    %401 = vperm.xlu0 %400, %v330
    %v402 = vpop.permute.xlu0 %401
    %403 = vset.pattern.permute.xlu0 0
    %404 = vperm.xlu0 %403, %v331
    %v405 = vpop.permute.xlu0 %404
    %406 = vset.pattern.permute.xlu0 0
    %407 = vperm.xlu0 %406, %v332
    %v408 = vpop.permute.xlu0 %407
    %409 = vset.pattern.permute.xlu0 0
    %410 = vperm.xlu0 %409, %v333
    %v411 = vpop.permute.xlu0 %410
    %412 = vset.pattern.permute.xlu0 0
    %413 = vperm.xlu0 %412, %v334
    %v414 = vpop.permute.xlu0 %413
    %415 = vset.pattern.permute.xlu0 0
    %416 = vperm.xlu0 %415, %v335
    %v417 = vpop.permute.xlu0 %416
    %418 = vset.pattern.permute.xlu0 0
    %419 = vperm.xlu0 %418, %v336
    %v420 = vpop.permute.xlu0 %419
    %421 = vset.pattern.permute.xlu0 0
    %422 = vperm.xlu0 %421, %v337
    %v423 = vpop.permute.xlu0 %422
    %424 = vset.pattern.permute.xlu0 0
    %425 = vperm.xlu0 %424, %v338
    %v426 = vpop.permute.xlu0 %425
    %427 = vset.pattern.permute.xlu0 0
    %428 = vperm.xlu0 %427, %v339
    %v429 = vpop.permute.xlu0 %428
    %430 = vset.pattern.permute.xlu0 0
    %431 = vperm.xlu0 %430, %v340
    %v432 = vpop.permute.xlu0 %431
    %433 = vset.pattern.permute.xlu0 0
    %434 = vperm.xlu0 %433, %v341
    %v435 = vpop.permute.xlu0 %434
    %436 = vset.pattern.permute.xlu0 0
    %437 = vperm.xlu0 %436, %v342
    %v438 = vpop.permute.xlu0 %437
    %439 = vset.pattern.permute.xlu0 0
    %440 = vperm.xlu0 %439, %v343
    %v441 = vpop.permute.xlu0 %440
    %442 = vset.pattern.permute.xlu0 0
    %443 = vperm.xlu0 %442, %v344
    %v444 = vpop.permute.xlu0 %443
    %445 = vset.pattern.permute.xlu0 0
    %446 = vperm.xlu0 %445, %v345
    %v447 = vpop.permute.xlu0 %446
    %448 = vset.pattern.permute.xlu0 0
    %449 = vperm.xlu0 %448, %v346
    %v450 = vpop.permute.xlu0 %449
    %451 = vset.pattern.permute.xlu0 0
    %452 = vperm.xlu0 %451, %v347
    %v453 = vpop.permute.xlu0 %452
    %454 = vset.pattern.permute.xlu0 0
    %455 = vperm.xlu0 %454, %v348
    %v456 = vpop.permute.xlu0 %455
    %457 = vset.pattern.permute.xlu0 0
    %458 = vperm.xlu0 %457, %v349
    %v459 = vpop.permute.xlu0 %458
    %460 = vset.pattern.permute.xlu0 0
    %461 = vperm.xlu0 %460, %v350
    %v462 = vpop.permute.xlu0 %461
    %463 = vset.pattern.permute.xlu0 0
    %464 = vperm.xlu0 %463, %v351
    %v465 = vpop.permute.xlu0 %464
    %466 = vset.pattern.permute.xlu0 0
    %467 = vperm.xlu0 %466, %v352
    %v468 = vpop.permute.xlu0 %467
    %469 = vset.pattern.permute.xlu0 0
    %470 = vperm.xlu0 %469, %v353
    %v471 = vpop.permute.xlu0 %470
    %472 = vset.pattern.permute.xlu0 0
    %473 = vperm.xlu0 %472, %v354
    %v474 = vpop.permute.xlu0 %473
    %475 = vset.pattern.permute.xlu0 0
    %476 = vperm.xlu0 %475, %v355
    %v477 = vpop.permute.xlu0 %476
    %478 = vset.pattern.permute.xlu0 0
    %479 = vperm.xlu0 %478, %v356
    %v480 = vpop.permute.xlu0 %479
    %481 = vset.pattern.permute.xlu0 0
    %482 = vperm.xlu0 %481, %v357
    %v483 = vpop.permute.xlu0 %482
    %484 = vset.pattern.permute.xlu0 0
    %485 = vperm.xlu0 %484, %v358
    %v486 = vpop.permute.xlu0 %485
    %v487 = vperm.slane %v393, %v168
    %v488 = vperm.slane %v396, %v168
    %v489 = vperm.slane %v399, %v168
    %v490 = vperm.slane %v402, %v168
    %v491 = vperm.slane %v405, %v168
    %v492 = vperm.slane %v408, %v168
    %v493 = vperm.slane %v411, %v168
    %v494 = vperm.slane %v414, %v168
    %v495 = vperm.slane %v417, %v168
    %v496 = vperm.slane %v420, %v168
    %v497 = vperm.slane %v423, %v168
    %v498 = vperm.slane %v426, %v168
    %v499 = vperm.slane %v429, %v168
    %v500 = vperm.slane %v432, %v168
    %v501 = vperm.slane %v435, %v168
    %v502 = vperm.slane %v438, %v168
    %v503 = vperm.slane %v441, %v168
    %v504 = vperm.slane %v444, %v168
    %v505 = vperm.slane %v447, %v168
    %v506 = vperm.slane %v450, %v168
    %v507 = vperm.slane %v453, %v168
    %v508 = vperm.slane %v456, %v168
    %v509 = vperm.slane %v459, %v168
    %v510 = vperm.slane %v462, %v168
    %v511 = vperm.slane %v465, %v168
    %v512 = vperm.slane %v468, %v168
    %v513 = vperm.slane %v471, %v168
    %v514 = vperm.slane %v474, %v168
    %v515 = vperm.slane %v477, %v168
    %v516 = vperm.slane %v480, %v168
    %v517 = vperm.slane %v483, %v168
    %v518 = vperm.slane %v486, %v168
    %v519 = vsel %vm183, %v488, %v487
    %vm520 = vcmask 1042434
    %v521 = vsel %vm520, %v489, %v519
    %vm522 = vcmask 1043459
    %v523 = vsel %vm522, %v490, %v521
    %vm524 = vcmask 1044484
    %v525 = vsel %vm524, %v491, %v523
    %vm526 = vcmask 1045509
    %v527 = vsel %vm526, %v492, %v525
    %vm528 = vcmask 1046534
    %v529 = vsel %vm528, %v493, %v527
    %vm530 = vcmask 1047559
    %v531 = vsel %vm530, %v494, %v529
    %v532 = vsel %vm183, %v496, %v495
    %v533 = vsel %vm520, %v497, %v532
    %v534 = vsel %vm522, %v498, %v533
    %v535 = vsel %vm524, %v499, %v534
    %v536 = vsel %vm526, %v500, %v535
    %v537 = vsel %vm528, %v501, %v536
    %v538 = vsel %vm530, %v502, %v537
    %v539 = vsel %vm183, %v504, %v503
    %v540 = vsel %vm520, %v505, %v539
    %v541 = vsel %vm522, %v506, %v540
    %v542 = vsel %vm524, %v507, %v541
    %v543 = vsel %vm526, %v508, %v542
    %v544 = vsel %vm528, %v509, %v543
    %v545 = vsel %vm530, %v510, %v544
    %v546 = vsel %vm183, %v512, %v511
    %v547 = vsel %vm520, %v513, %v546
    %v548 = vsel %vm522, %v514, %v547
    %v549 = vsel %vm524, %v515, %v548
    %v550 = vsel %vm526, %v516, %v549
    %v551 = vsel %vm528, %v517, %v550
    %v552 = vsel %vm530, %v518, %v551
    %vm557 = vcmask 15360
    %v558 = vsel %vm557, %v531, 0.0
    %559 = vadd.xlane.f32.xlu0 %v558
    %v560 = vpop.xlane.xlu0 %559
    %v561 = vsel %vm557, %v538, 0.0
    %562 = vadd.xlane.f32.xlu0 %v561
    %v563 = vpop.xlane.xlu0 %562
    %v564 = vsel %vm557, %v545, 0.0
    %565 = vadd.xlane.f32.xlu0 %v564
    %v566 = vpop.xlane.xlu0 %565
    %v567 = vsel %vm557, %v552, 0.0
    %568 = vadd.xlane.f32.xlu0 %v567
    %v569 = vpop.xlane.xlu0 %568
    %v570 = vmul.f32 %v86, %v103
    %v571 = vmul.f32 %v89, %v109
    %v572 = vmul.f32 %v86, %v116
    %v573 = vmul.f32 %v89, %v122
    %v574 = vmul.f32 %v92, %v103
    %v575 = vmul.f32 %v95, %v109
    %v576 = vmul.f32 %v92, %v116
    %v577 = vmul.f32 %v95, %v122
    %586 = vset.pattern.permute.xlu0 0
    %587 = vperm.xlu0 %586, %v570
    %v588 = vpop.permute.xlu0 %587
    %589 = vset.pattern.permute.xlu0 0
    %590 = vperm.xlu0 %589, %v571
    %v591 = vpop.permute.xlu0 %590
    %592 = vset.pattern.permute.xlu0 0
    %593 = vperm.xlu0 %592, %v572
    %v594 = vpop.permute.xlu0 %593
    %595 = vset.pattern.permute.xlu0 0
    %596 = vperm.xlu0 %595, %v573
    %v597 = vpop.permute.xlu0 %596
    %598 = vset.pattern.permute.xlu0 0
    %599 = vperm.xlu0 %598, %v574
    %v600 = vpop.permute.xlu0 %599
    %601 = vset.pattern.permute.xlu0 0
    %602 = vperm.xlu0 %601, %v575
    %v603 = vpop.permute.xlu0 %602
    %604 = vset.pattern.permute.xlu0 0
    %605 = vperm.xlu0 %604, %v576
    %v606 = vpop.permute.xlu0 %605
    %607 = vset.pattern.permute.xlu0 0
    %608 = vperm.xlu0 %607, %v577
    %v609 = vpop.permute.xlu0 %608
    %v610 = vperm.slane %v588, %v168
    %v611 = vperm.slane %v591, %v170
    %v612 = vsel %vm172, %v611, %v610
    %v613 = vperm.slane %v594, %v168
    %v614 = vperm.slane %v597, %v170
    %v615 = vsel %vm172, %v614, %v613
    %v616 = vperm.slane %v600, %v168
    %v617 = vperm.slane %v603, %v170
    %v618 = vsel %vm172, %v617, %v616
    %v619 = vperm.slane %v606, %v168
    %v620 = vperm.slane %v609, %v170
    %v621 = vsel %vm172, %v620, %v619
    %v622 = vsel %vm183, %v615, %v612
    %v623 = vsel %vm183, %v621, %v618
    %v626 = vsel %vm188, %v622, 0.0
    %627 = vadd.xlane.f32.xlu0 %v626
    %v628 = vpop.xlane.xlu0 %627
    %v629 = vsel %vm188, %v623, 0.0
    %630 = vadd.xlane.f32.xlu0 %v629
    %v631 = vpop.xlane.xlu0 %630
    %v632 = vmax.f32 %v628, 0.0
    %v633 = vmax.f32 %v631, 0.0
    %v634 = vmul.f32 %v632, %v205
    %v635 = vmul.f32 %v632, %v212
    %v636 = vmul.f32 %v632, %v219
    %v637 = vmul.f32 %v632, %v226
    %v638 = vmul.f32 %v632, %v233
    %v639 = vmul.f32 %v632, %v240
    %v640 = vmul.f32 %v632, %v247
    %v641 = vmul.f32 %v632, %v254
    %v642 = vmul.f32 %v632, %v261
    %v643 = vmul.f32 %v632, %v268
    %v644 = vmul.f32 %v632, %v275
    %v645 = vmul.f32 %v632, %v282
    %v646 = vmul.f32 %v632, %v289
    %v647 = vmul.f32 %v632, %v296
    %v648 = vmul.f32 %v632, %v303
    %v649 = vmul.f32 %v632, %v310
    %v650 = vmul.f32 %v633, %v205
    %v651 = vmul.f32 %v633, %v212
    %v652 = vmul.f32 %v633, %v219
    %v653 = vmul.f32 %v633, %v226
    %v654 = vmul.f32 %v633, %v233
    %v655 = vmul.f32 %v633, %v240
    %v656 = vmul.f32 %v633, %v247
    %v657 = vmul.f32 %v633, %v254
    %v658 = vmul.f32 %v633, %v261
    %v659 = vmul.f32 %v633, %v268
    %v660 = vmul.f32 %v633, %v275
    %v661 = vmul.f32 %v633, %v282
    %v662 = vmul.f32 %v633, %v289
    %v663 = vmul.f32 %v633, %v296
    %v664 = vmul.f32 %v633, %v303
    %v665 = vmul.f32 %v633, %v310
    %698 = vset.pattern.permute.xlu0 0
    %699 = vperm.xlu0 %698, %v634
    %v700 = vpop.permute.xlu0 %699
    %701 = vset.pattern.permute.xlu0 0
    %702 = vperm.xlu0 %701, %v635
    %v703 = vpop.permute.xlu0 %702
    %704 = vset.pattern.permute.xlu0 0
    %705 = vperm.xlu0 %704, %v636
    %v706 = vpop.permute.xlu0 %705
    %707 = vset.pattern.permute.xlu0 0
    %708 = vperm.xlu0 %707, %v637
    %v709 = vpop.permute.xlu0 %708
    %710 = vset.pattern.permute.xlu0 0
    %711 = vperm.xlu0 %710, %v638
    %v712 = vpop.permute.xlu0 %711
    %713 = vset.pattern.permute.xlu0 0
    %714 = vperm.xlu0 %713, %v639
    %v715 = vpop.permute.xlu0 %714
    %716 = vset.pattern.permute.xlu0 0
    %717 = vperm.xlu0 %716, %v640
    %v718 = vpop.permute.xlu0 %717
    %719 = vset.pattern.permute.xlu0 0
    %720 = vperm.xlu0 %719, %v641
    %v721 = vpop.permute.xlu0 %720
    %722 = vset.pattern.permute.xlu0 0
    %723 = vperm.xlu0 %722, %v642
    %v724 = vpop.permute.xlu0 %723
    %725 = vset.pattern.permute.xlu0 0
    %726 = vperm.xlu0 %725, %v643
    %v727 = vpop.permute.xlu0 %726
    %728 = vset.pattern.permute.xlu0 0
    %729 = vperm.xlu0 %728, %v644
    %v730 = vpop.permute.xlu0 %729
    %731 = vset.pattern.permute.xlu0 0
    %732 = vperm.xlu0 %731, %v645
    %v733 = vpop.permute.xlu0 %732
    %734 = vset.pattern.permute.xlu0 0
    %735 = vperm.xlu0 %734, %v646
    %v736 = vpop.permute.xlu0 %735
    %737 = vset.pattern.permute.xlu0 0
    %738 = vperm.xlu0 %737, %v647
    %v739 = vpop.permute.xlu0 %738
    %740 = vset.pattern.permute.xlu0 0
    %741 = vperm.xlu0 %740, %v648
    %v742 = vpop.permute.xlu0 %741
    %743 = vset.pattern.permute.xlu0 0
    %744 = vperm.xlu0 %743, %v649
    %v745 = vpop.permute.xlu0 %744
    %746 = vset.pattern.permute.xlu0 0
    %747 = vperm.xlu0 %746, %v650
    %v748 = vpop.permute.xlu0 %747
    %749 = vset.pattern.permute.xlu0 0
    %750 = vperm.xlu0 %749, %v651
    %v751 = vpop.permute.xlu0 %750
    %752 = vset.pattern.permute.xlu0 0
    %753 = vperm.xlu0 %752, %v652
    %v754 = vpop.permute.xlu0 %753
    %755 = vset.pattern.permute.xlu0 0
    %756 = vperm.xlu0 %755, %v653
    %v757 = vpop.permute.xlu0 %756
    %758 = vset.pattern.permute.xlu0 0
    %759 = vperm.xlu0 %758, %v654
    %v760 = vpop.permute.xlu0 %759
    %761 = vset.pattern.permute.xlu0 0
    %762 = vperm.xlu0 %761, %v655
    %v763 = vpop.permute.xlu0 %762
    %764 = vset.pattern.permute.xlu0 0
    %765 = vperm.xlu0 %764, %v656
    %v766 = vpop.permute.xlu0 %765
    %767 = vset.pattern.permute.xlu0 0
    %768 = vperm.xlu0 %767, %v657
    %v769 = vpop.permute.xlu0 %768
    %770 = vset.pattern.permute.xlu0 0
    %771 = vperm.xlu0 %770, %v658
    %v772 = vpop.permute.xlu0 %771
    %773 = vset.pattern.permute.xlu0 0
    %774 = vperm.xlu0 %773, %v659
    %v775 = vpop.permute.xlu0 %774
    %776 = vset.pattern.permute.xlu0 0
    %777 = vperm.xlu0 %776, %v660
    %v778 = vpop.permute.xlu0 %777
    %779 = vset.pattern.permute.xlu0 0
    %780 = vperm.xlu0 %779, %v661
    %v781 = vpop.permute.xlu0 %780
    %782 = vset.pattern.permute.xlu0 0
    %783 = vperm.xlu0 %782, %v662
    %v784 = vpop.permute.xlu0 %783
    %785 = vset.pattern.permute.xlu0 0
    %786 = vperm.xlu0 %785, %v663
    %v787 = vpop.permute.xlu0 %786
    %788 = vset.pattern.permute.xlu0 0
    %789 = vperm.xlu0 %788, %v664
    %v790 = vpop.permute.xlu0 %789
    %791 = vset.pattern.permute.xlu0 0
    %792 = vperm.xlu0 %791, %v665
    %v793 = vpop.permute.xlu0 %792
    %v794 = vperm.slane %v700, %v168
    %v795 = vperm.slane %v703, %v168
    %v796 = vperm.slane %v706, %v168
    %v797 = vperm.slane %v709, %v168
    %v798 = vperm.slane %v712, %v168
    %v799 = vperm.slane %v715, %v168
    %v800 = vperm.slane %v718, %v168
    %v801 = vperm.slane %v721, %v168
    %v802 = vperm.slane %v724, %v168
    %v803 = vperm.slane %v727, %v168
    %v804 = vperm.slane %v730, %v168
    %v805 = vperm.slane %v733, %v168
    %v806 = vperm.slane %v736, %v168
    %v807 = vperm.slane %v739, %v168
    %v808 = vperm.slane %v742, %v168
    %v809 = vperm.slane %v745, %v168
    %v810 = vperm.slane %v748, %v168
    %v811 = vperm.slane %v751, %v168
    %v812 = vperm.slane %v754, %v168
    %v813 = vperm.slane %v757, %v168
    %v814 = vperm.slane %v760, %v168
    %v815 = vperm.slane %v763, %v168
    %v816 = vperm.slane %v766, %v168
    %v817 = vperm.slane %v769, %v168
    %v818 = vperm.slane %v772, %v168
    %v819 = vperm.slane %v775, %v168
    %v820 = vperm.slane %v778, %v168
    %v821 = vperm.slane %v781, %v168
    %v822 = vperm.slane %v784, %v168
    %v823 = vperm.slane %v787, %v168
    %v824 = vperm.slane %v790, %v168
    %v825 = vperm.slane %v793, %v168
    %v826 = vsel %vm183, %v795, %v794
    %v827 = vsel %vm520, %v796, %v826
    %v828 = vsel %vm522, %v797, %v827
    %v829 = vsel %vm524, %v798, %v828
    %v830 = vsel %vm526, %v799, %v829
    %v831 = vsel %vm528, %v800, %v830
    %v832 = vsel %vm530, %v801, %v831
    %v833 = vsel %vm183, %v803, %v802
    %v834 = vsel %vm520, %v804, %v833
    %v835 = vsel %vm522, %v805, %v834
    %v836 = vsel %vm524, %v806, %v835
    %v837 = vsel %vm526, %v807, %v836
    %v838 = vsel %vm528, %v808, %v837
    %v839 = vsel %vm530, %v809, %v838
    %v840 = vsel %vm183, %v811, %v810
    %v841 = vsel %vm520, %v812, %v840
    %v842 = vsel %vm522, %v813, %v841
    %v843 = vsel %vm524, %v814, %v842
    %v844 = vsel %vm526, %v815, %v843
    %v845 = vsel %vm528, %v816, %v844
    %v846 = vsel %vm530, %v817, %v845
    %v847 = vsel %vm183, %v819, %v818
    %v848 = vsel %vm520, %v820, %v847
    %v849 = vsel %vm522, %v821, %v848
    %v850 = vsel %vm524, %v822, %v849
    %v851 = vsel %vm526, %v823, %v850
    %v852 = vsel %vm528, %v824, %v851
    %v853 = vsel %vm530, %v825, %v852
    %v858 = vsel %vm557, %v832, 0.0
    %859 = vadd.xlane.f32.xlu0 %v858
    %v860 = vpop.xlane.xlu0 %859
    %v861 = vsel %vm557, %v839, 0.0
    %862 = vadd.xlane.f32.xlu0 %v861
    %v863 = vpop.xlane.xlu0 %862
    %v864 = vsel %vm557, %v846, 0.0
    %865 = vadd.xlane.f32.xlu0 %v864
    %v866 = vpop.xlane.xlu0 %865
    %v867 = vsel %vm557, %v853, 0.0
    %868 = vadd.xlane.f32.xlu0 %v867
    %v869 = vpop.xlane.xlu0 %868
    %v870 = vadd.f32 %v560, %v860
    %v871 = vadd.f32 %v563, %v863
    %v872 = vadd.f32 %v566, %v866
    %v873 = vadd.f32 %v569, %v869
    %v874 = vxor.u32 %v870, 2147483648
    %v875 = vxor.u32 %v871, 2147483648
    %v876 = vxor.u32 %v872, 2147483648
    %v877 = vxor.u32 %v873, 2147483648
    %v878 = vmul.f32 %v874, 1.442695
    %v879 = vpow.pop %v878
    %v880 = vmul.f32 %v875, 1.442695
    %v881 = vpow.pop %v880
    %v882 = vmul.f32 %v876, 1.442695
    %v883 = vpow.pop %v882
    %v884 = vmul.f32 %v877, 1.442695
    %v885 = vpow.pop %v884
    %v886 = vadd.f32 %v879, 1.0
    %v887 = vadd.f32 %v881, 1.0
    %v888 = vadd.f32 %v883, 1.0
    %v889 = vadd.f32 %v885, 1.0
    %v890 = vrcp.pop %v886
    %v891 = vmul.f32 %v886, %v890
    %v892 = vsub.f32 1.0, %v891
    %v893 = vmul.f32 %v890, %v892
    %v894 = vadd.f32 %v890, %v893
    %vm895 = vweird.f32 %v886
    %vm896 = vweird.f32 %v890
    %vm897 = vmor %vm895, %vm896
    %v898 = vsel %vm897, %v890, %v894
    %v899 = vand.u32 2147483647, %v886
    %vm900 = vcmp.eq.f32.partialorder %v899, 8.507059e+37
    %v901 = vand.u32 %v886, 2147483648
    %v902 = vor.u32 1.1754944e-38, %v901
    %v903 = vsel %vm900, %v902, %v898
    %v904 = vmul.f32 1.0, %v903
    %v905 = vrcp.pop %v887
    %v906 = vmul.f32 %v887, %v905
    %v907 = vsub.f32 1.0, %v906
    %v908 = vmul.f32 %v905, %v907
    %v909 = vadd.f32 %v905, %v908
    %vm910 = vweird.f32 %v887
    %vm911 = vweird.f32 %v905
    %vm912 = vmor %vm910, %vm911
    %v913 = vsel %vm912, %v905, %v909
    %v914 = vand.u32 2147483647, %v887
    %vm915 = vcmp.eq.f32.partialorder %v914, 8.507059e+37
    %v916 = vand.u32 %v887, 2147483648
    %v917 = vor.u32 1.1754944e-38, %v916
    %v918 = vsel %vm915, %v917, %v913
    %v919 = vmul.f32 1.0, %v918
    %v920 = vrcp.pop %v888
    %v921 = vmul.f32 %v888, %v920
    %v922 = vsub.f32 1.0, %v921
    %v923 = vmul.f32 %v920, %v922
    %v924 = vadd.f32 %v920, %v923
    %vm925 = vweird.f32 %v888
    %vm926 = vweird.f32 %v920
    %vm927 = vmor %vm925, %vm926
    %v928 = vsel %vm927, %v920, %v924
    %v929 = vand.u32 2147483647, %v888
    %vm930 = vcmp.eq.f32.partialorder %v929, 8.507059e+37
    %v931 = vand.u32 %v888, 2147483648
    %v932 = vor.u32 1.1754944e-38, %v931
    %v933 = vsel %vm930, %v932, %v928
    %v934 = vmul.f32 1.0, %v933
    %v935 = vrcp.pop %v889
    %v936 = vmul.f32 %v889, %v935
    %v937 = vsub.f32 1.0, %v936
    %v938 = vmul.f32 %v935, %v937
    %v939 = vadd.f32 %v935, %v938
    %vm940 = vweird.f32 %v889
    %vm941 = vweird.f32 %v935
    %vm942 = vmor %vm940, %vm941
    %v943 = vsel %vm942, %v935, %v939
    %v944 = vand.u32 2147483647, %v889
    %vm945 = vcmp.eq.f32.partialorder %v944, 8.507059e+37
    %v946 = vand.u32 %v889, 2147483648
    %v947 = vor.u32 1.1754944e-38, %v946
    %v948 = vsel %vm945, %v947, %v943
    %v949 = vmul.f32 1.0, %v948
    %v950 = vmul.f32 %v50, %v904
    %v951 = vmul.f32 %v51, %v904
    %v952 = vmul.f32 %v52, %v919
    %v953 = vmul.f32 %v53, %v919
    %v954 = vmul.f32 %v54, %v934
    %v955 = vmul.f32 %v55, %v934
    %v956 = vmul.f32 %v56, %v949
    %v957 = vmul.f32 %v57, %v949
    %v958 = vadd.f32 %v950, %v952
    %v959 = vrot.slane %v958, 4
    %v960 = vadd.f32 %v958, %v959
    %v961 = vrot.slane %v960, 2
    %v962 = vadd.f32 %v960, %v961
    %v963 = vrot.slane %v962, 1
    %v964 = vadd.f32 %v962, %v963
    %v965 = vadd.f32 %v951, %v953
    %v966 = vrot.slane %v965, 4
    %v967 = vadd.f32 %v965, %v966
    %v968 = vrot.slane %v967, 2
    %v969 = vadd.f32 %v967, %v968
    %v970 = vrot.slane %v969, 1
    %v971 = vadd.f32 %v969, %v970
    %v972 = vadd.f32 %v954, %v956
    %v973 = vrot.slane %v972, 4
    %v974 = vadd.f32 %v972, %v973
    %v975 = vrot.slane %v974, 2
    %v976 = vadd.f32 %v974, %v975
    %v977 = vrot.slane %v976, 1
    %v978 = vadd.f32 %v976, %v977
    %v979 = vadd.f32 %v955, %v957
    %v980 = vrot.slane %v979, 4
    %v981 = vadd.f32 %v979, %v980
    %v982 = vrot.slane %v981, 2
    %v983 = vadd.f32 %v981, %v982
    %v984 = vrot.slane %v983, 1
    %v985 = vadd.f32 %v983, %v984
    %v986 = vrcp.pop 16.0
    %v987 = vmul.f32 16.0, %v986
    %v988 = vsub.f32 1.0, %v987
    %v989 = vmul.f32 %v986, %v988
    %v990 = vadd.f32 %v986, %v989
    %vm991 = vweird.f32 %v986
    %v992 = vsel %vm991, %v986, %v990
    %v993 = vmul.f32 %v964, %v992
    %v994 = vmul.f32 %v971, %v992
    %v995 = vmul.f32 %v978, %v992
    %v996 = vmul.f32 %v985, %v992
    %v997 = vmax.f32 %v950, %v952
    %v998 = vrot.slane %v997, 4
    %v999 = vmax.f32 %v997, %v998
    %v1000 = vrot.slane %v999, 2
    %v1001 = vmax.f32 %v999, %v1000
    %v1002 = vrot.slane %v1001, 1
    %v1003 = vmax.f32 %v1001, %v1002
    %v1004 = vmax.f32 %v951, %v953
    %v1005 = vrot.slane %v1004, 4
    %v1006 = vmax.f32 %v1004, %v1005
    %v1007 = vrot.slane %v1006, 2
    %v1008 = vmax.f32 %v1006, %v1007
    %v1009 = vrot.slane %v1008, 1
    %v1010 = vmax.f32 %v1008, %v1009
    %v1011 = vmax.f32 %v954, %v956
    %v1012 = vrot.slane %v1011, 4
    %v1013 = vmax.f32 %v1011, %v1012
    %v1014 = vrot.slane %v1013, 2
    %v1015 = vmax.f32 %v1013, %v1014
    %v1016 = vrot.slane %v1015, 1
    %v1017 = vmax.f32 %v1015, %v1016
    %v1018 = vmax.f32 %v955, %v957
    %v1019 = vrot.slane %v1018, 4
    %v1020 = vmax.f32 %v1018, %v1019
    %v1021 = vrot.slane %v1020, 2
    %v1022 = vmax.f32 %v1020, %v1021
    %v1023 = vrot.slane %v1022, 1
    %v1024 = vmax.f32 %v1022, %v1023
    %v1029 = vsel %vm183, %v995, %v993
    %v1030 = vsel %vm183, %v996, %v994
    %v1037 = vsel %vm183, %v1017, %v1003
    %v1038 = vsel %vm183, %v1024, %v1010
    %v1041 = vld [vmem:[#allocation5] sm:$0xff]
    %v1042 = vld [vmem:[#allocation5 + $0x8] sm:$0xff]
    %v1043 = vld [vmem:[#allocation5 + $0x10] sm:$0xff]
    %v1044 = vld [vmem:[#allocation5 + $0x18] sm:$0xff]
    %v1045 = vld [vmem:[#allocation5 + $0x20] sm:$0xff]
    %v1046 = vld [vmem:[#allocation5 + $0x28] sm:$0xff]
    %v1047 = vld [vmem:[#allocation5 + $0x30] sm:$0xff]
    %v1048 = vld [vmem:[#allocation5 + $0x38] sm:$0xff]
    %v1049 = vld [vmem:[#allocation5 + $0x40] sm:$0xff]
    %v1050 = vld [vmem:[#allocation5 + $0x48] sm:$0xff]
    %v1051 = vld [vmem:[#allocation5 + $0x50] sm:$0xff]
    %v1052 = vld [vmem:[#allocation5 + $0x58] sm:$0xff]
    %v1053 = vld [vmem:[#allocation5 + $0x60] sm:$0xff]
    %v1054 = vld [vmem:[#allocation5 + $0x68] sm:$0xff]
    %v1055 = vld [vmem:[#allocation5 + $0x70] sm:$0xff]
    %v1056 = vld [vmem:[#allocation5 + $0x78] sm:$0xff]
    %v1057 = vld [vmem:[#allocation5 + $0x80] sm:$0xff]
    %v1058 = vld [vmem:[#allocation5 + $0x88] sm:$0xff]
    %v1059 = vld [vmem:[#allocation5 + $0x90] sm:$0xff]
    %v1060 = vld [vmem:[#allocation5 + $0x98] sm:$0xff]
    %v1061 = vld [vmem:[#allocation5 + $0xa0] sm:$0xff]
    %v1062 = vld [vmem:[#allocation5 + $0xa8] sm:$0xff]
    %v1063 = vld [vmem:[#allocation5 + $0xb0] sm:$0xff]
    %v1064 = vld [vmem:[#allocation5 + $0xb8] sm:$0xff]
    %v1065 = vld [vmem:[#allocation5 + $0xc0] sm:$0xff]
    %v1066 = vld [vmem:[#allocation5 + $0xc8] sm:$0xff]
    %v1067 = vld [vmem:[#allocation5 + $0xd0] sm:$0xff]
    %v1068 = vld [vmem:[#allocation5 + $0xd8] sm:$0xff]
    %v1069 = vld [vmem:[#allocation5 + $0xe0] sm:$0xff]
    %v1070 = vld [vmem:[#allocation5 + $0xe8] sm:$0xff]
    %v1071 = vld [vmem:[#allocation5 + $0xf0] sm:$0xff]
    %v1072 = vld [vmem:[#allocation5 + $0xf8] sm:$0xff]
    %v1073 = vld [vmem:[#allocation5 + $0x100] sm:$0xff]
    %v1074 = vld [vmem:[#allocation5 + $0x108] sm:$0xff]
    %v1075 = vld [vmem:[#allocation5 + $0x110] sm:$0xff]
    %v1076 = vld [vmem:[#allocation5 + $0x118] sm:$0xff]
    %v1077 = vld [vmem:[#allocation5 + $0x120] sm:$0xff]
    %v1078 = vld [vmem:[#allocation5 + $0x128] sm:$0xff]
    %v1079 = vld [vmem:[#allocation5 + $0x130] sm:$0xff]
    %v1080 = vld [vmem:[#allocation5 + $0x138] sm:$0xff]
    %v1081 = vld [vmem:[#allocation5 + $0x140] sm:$0xff]
    %v1082 = vld [vmem:[#allocation5 + $0x148] sm:$0xff]
    %v1083 = vld [vmem:[#allocation5 + $0x150] sm:$0xff]
    %v1084 = vld [vmem:[#allocation5 + $0x158] sm:$0xff]
    %v1085 = vld [vmem:[#allocation5 + $0x160] sm:$0xff]
    %v1086 = vld [vmem:[#allocation5 + $0x168] sm:$0xff]
    %v1087 = vld [vmem:[#allocation5 + $0x170] sm:$0xff]
    %v1088 = vld [vmem:[#allocation5 + $0x178] sm:$0xff]
    %v1089 = vld [vmem:[#allocation5 + $0x180] sm:$0xff]
    %v1090 = vld [vmem:[#allocation5 + $0x188] sm:$0xff]
    %v1091 = vld [vmem:[#allocation5 + $0x190] sm:$0xff]
    %v1092 = vld [vmem:[#allocation5 + $0x198] sm:$0xff]
    %v1093 = vld [vmem:[#allocation5 + $0x1a0] sm:$0xff]
    %v1094 = vld [vmem:[#allocation5 + $0x1a8] sm:$0xff]
    %v1095 = vld [vmem:[#allocation5 + $0x1b0] sm:$0xff]
    %v1096 = vld [vmem:[#allocation5 + $0x1b8] sm:$0xff]
    %v1097 = vld [vmem:[#allocation5 + $0x1c0] sm:$0xff]
    %v1098 = vld [vmem:[#allocation5 + $0x1c8] sm:$0xff]
    %v1099 = vld [vmem:[#allocation5 + $0x1d0] sm:$0xff]
    %v1100 = vld [vmem:[#allocation5 + $0x1d8] sm:$0xff]
    %v1101 = vld [vmem:[#allocation5 + $0x1e0] sm:$0xff]
    %v1102 = vld [vmem:[#allocation5 + $0x1e8] sm:$0xff]
    %v1103 = vld [vmem:[#allocation5 + $0x1f0] sm:$0xff]
    %v1104 = vld [vmem:[#allocation5 + $0x1f8] sm:$0xff]
    %v1105 = vld [vmem:[#allocation5 + $0x200] sm:$0xff]
    %v1106 = vld [vmem:[#allocation5 + $0x208] sm:$0xff]
    %v1107 = vld [vmem:[#allocation5 + $0x210] sm:$0xff]
    %v1108 = vld [vmem:[#allocation5 + $0x218] sm:$0xff]
    %v1109 = vld [vmem:[#allocation5 + $0x220] sm:$0xff]
    %v1110 = vld [vmem:[#allocation5 + $0x228] sm:$0xff]
    %v1111 = vld [vmem:[#allocation5 + $0x230] sm:$0xff]
    %v1112 = vld [vmem:[#allocation5 + $0x238] sm:$0xff]
    %v1113 = vld [vmem:[#allocation5 + $0x240] sm:$0xff]
    %v1114 = vld [vmem:[#allocation5 + $0x248] sm:$0xff]
    %v1115 = vld [vmem:[#allocation5 + $0x250] sm:$0xff]
    %v1116 = vld [vmem:[#allocation5 + $0x258] sm:$0xff]
    %v1117 = vld [vmem:[#allocation5 + $0x260] sm:$0xff]
    %v1118 = vld [vmem:[#allocation5 + $0x268] sm:$0xff]
    %v1119 = vld [vmem:[#allocation5 + $0x270] sm:$0xff]
    %v1120 = vld [vmem:[#allocation5 + $0x278] sm:$0xff]
    %v1121 = vld [vmem:[#allocation5 + $0x280] sm:$0xff]
    %v1122 = vld [vmem:[#allocation5 + $0x288] sm:$0xff]
    %v1123 = vld [vmem:[#allocation5 + $0x290] sm:$0xff]
    %v1124 = vld [vmem:[#allocation5 + $0x298] sm:$0xff]
    %v1125 = vld [vmem:[#allocation5 + $0x2a0] sm:$0xff]
    %v1126 = vld [vmem:[#allocation5 + $0x2a8] sm:$0xff]
    %v1127 = vld [vmem:[#allocation5 + $0x2b0] sm:$0xff]
    %v1128 = vld [vmem:[#allocation5 + $0x2b8] sm:$0xff]
    %v1129 = vld [vmem:[#allocation5 + $0x2c0] sm:$0xff]
    %v1130 = vld [vmem:[#allocation5 + $0x2c8] sm:$0xff]
    %v1131 = vld [vmem:[#allocation5 + $0x2d0] sm:$0xff]
    %v1132 = vld [vmem:[#allocation5 + $0x2d8] sm:$0xff]
    %v1133 = vld [vmem:[#allocation5 + $0x2e0] sm:$0xff]
    %v1134 = vld [vmem:[#allocation5 + $0x2e8] sm:$0xff]
    %v1135 = vld [vmem:[#allocation5 + $0x2f0] sm:$0xff]
    %v1136 = vld [vmem:[#allocation5 + $0x2f8] sm:$0xff]
    %v1137 = vld [vmem:[#allocation5 + $0x300] sm:$0xff]
    %v1138 = vld [vmem:[#allocation5 + $0x308] sm:$0xff]
    %v1139 = vld [vmem:[#allocation5 + $0x310] sm:$0xff]
    %v1140 = vld [vmem:[#allocation5 + $0x318] sm:$0xff]
    %v1141 = vld [vmem:[#allocation5 + $0x320] sm:$0xff]
    %v1142 = vld [vmem:[#allocation5 + $0x328] sm:$0xff]
    %v1143 = vld [vmem:[#allocation5 + $0x330] sm:$0xff]
    %v1144 = vld [vmem:[#allocation5 + $0x338] sm:$0xff]
    %v1145 = vld [vmem:[#allocation5 + $0x340] sm:$0xff]
    %v1146 = vld [vmem:[#allocation5 + $0x348] sm:$0xff]
    %v1147 = vld [vmem:[#allocation5 + $0x350] sm:$0xff]
    %v1148 = vld [vmem:[#allocation5 + $0x358] sm:$0xff]
    %v1149 = vld [vmem:[#allocation5 + $0x360] sm:$0xff]
    %v1150 = vld [vmem:[#allocation5 + $0x368] sm:$0xff]
    %v1151 = vld [vmem:[#allocation5 + $0x370] sm:$0xff]
    %v1152 = vld [vmem:[#allocation5 + $0x378] sm:$0xff]
    %v1153 = vld [vmem:[#allocation5 + $0x380] sm:$0xff]
    %v1154 = vld [vmem:[#allocation5 + $0x388] sm:$0xff]
    %v1155 = vld [vmem:[#allocation5 + $0x390] sm:$0xff]
    %v1156 = vld [vmem:[#allocation5 + $0x398] sm:$0xff]
    %v1157 = vld [vmem:[#allocation5 + $0x3a0] sm:$0xff]
    %v1158 = vld [vmem:[#allocation5 + $0x3a8] sm:$0xff]
    %v1159 = vld [vmem:[#allocation5 + $0x3b0] sm:$0xff]
    %v1160 = vld [vmem:[#allocation5 + $0x3b8] sm:$0xff]
    %v1161 = vld [vmem:[#allocation5 + $0x3c0] sm:$0xff]
    %v1162 = vld [vmem:[#allocation5 + $0x3c8] sm:$0xff]
    %v1163 = vld [vmem:[#allocation5 + $0x3d0] sm:$0xff]
    %v1164 = vld [vmem:[#allocation5 + $0x3d8] sm:$0xff]
    %v1165 = vld [vmem:[#allocation5 + $0x3e0] sm:$0xff]
    %v1166 = vld [vmem:[#allocation5 + $0x3e8] sm:$0xff]
    %v1167 = vld [vmem:[#allocation5 + $0x3f0] sm:$0xff]
    %v1168 = vld [vmem:[#allocation5 + $0x3f8] sm:$0xff]
    %1169 = vmatpush.msra.mxu0 %v1071
    %1170 = vmatpush.msra.mxu0 %v1069
    %1171 = vmatpush.msra.mxu0 %v1067
    %1172 = vmatpush.msra.mxu0 %v1065
    %1173 = vmatpush.msra.mxu0 %v1063
    %1174 = vmatpush.msra.mxu0 %v1061
    %1175 = vmatpush.msra.mxu0 %v1059
    %1176 = vmatpush.msra.mxu0 %v1057
    %1177 = vmatpush.msra.mxu0 %v1055
    %1178 = vmatpush.msra.mxu0 %v1053
    %1179 = vmatpush.msra.mxu0 %v1051
    %1180 = vmatpush.msra.mxu0 %v1049
    %1181 = vmatpush.msra.mxu0 %v1047
    %1182 = vmatpush.msra.mxu0 %v1045
    %1183 = vmatpush.msra.mxu0 %v1043
    %1184 = vmatpush.msra.mxu0 %v1041
    %1185 = vmatmul.f32.gmra.mxu0 %v1029
    %v1186 = vpop.f32.mrf.mxu0
    %v1187 = vadd.f32 0.0, %v1186
    %1188 = vdwg.mxu0
    %1189 = vmatpush.msra.mxu0 %v1103
    %1190 = vmatpush.msra.mxu0 %v1101
    %1191 = vmatpush.msra.mxu0 %v1099
    %1192 = vmatpush.msra.mxu0 %v1097
    %1193 = vmatpush.msra.mxu0 %v1095
    %1194 = vmatpush.msra.mxu0 %v1093
    %1195 = vmatpush.msra.mxu0 %v1091
    %1196 = vmatpush.msra.mxu0 %v1089
    %1197 = vmatpush.msra.mxu0 %v1087
    %1198 = vmatpush.msra.mxu0 %v1085
    %1199 = vmatpush.msra.mxu0 %v1083
    %1200 = vmatpush.msra.mxu0 %v1081
    %1201 = vmatpush.msra.mxu0 %v1079
    %1202 = vmatpush.msra.mxu0 %v1077
    %1203 = vmatpush.msra.mxu0 %v1075
    %1204 = vmatpush.msra.mxu0 %v1073
    %1205 = vmatmul.f32.gmra.mxu0 %v1030
    %v1206 = vpop.f32.mrf.mxu0
    %v1207 = vadd.f32 %v1187, %v1206
    %1208 = vdwg.mxu0
    %1209 = vmatpush.msra.mxu0 %v1135
    %1210 = vmatpush.msra.mxu0 %v1133
    %1211 = vmatpush.msra.mxu0 %v1131
    %1212 = vmatpush.msra.mxu0 %v1129
    %1213 = vmatpush.msra.mxu0 %v1127
    %1214 = vmatpush.msra.mxu0 %v1125
    %1215 = vmatpush.msra.mxu0 %v1123
    %1216 = vmatpush.msra.mxu0 %v1121
    %1217 = vmatpush.msra.mxu0 %v1119
    %1218 = vmatpush.msra.mxu0 %v1117
    %1219 = vmatpush.msra.mxu0 %v1115
    %1220 = vmatpush.msra.mxu0 %v1113
    %1221 = vmatpush.msra.mxu0 %v1111
    %1222 = vmatpush.msra.mxu0 %v1109
    %1223 = vmatpush.msra.mxu0 %v1107
    %1224 = vmatpush.msra.mxu0 %v1105
    %1225 = vmatmul.f32.gmra.mxu0 %v1037
    %v1226 = vpop.f32.mrf.mxu0
    %v1227 = vadd.f32 %v1207, %v1226
    %1228 = vdwg.mxu0
    %1229 = vmatpush.msra.mxu0 %v1167
    %1230 = vmatpush.msra.mxu0 %v1165
    %1231 = vmatpush.msra.mxu0 %v1163
    %1232 = vmatpush.msra.mxu0 %v1161
    %1233 = vmatpush.msra.mxu0 %v1159
    %1234 = vmatpush.msra.mxu0 %v1157
    %1235 = vmatpush.msra.mxu0 %v1155
    %1236 = vmatpush.msra.mxu0 %v1153
    %1237 = vmatpush.msra.mxu0 %v1151
    %1238 = vmatpush.msra.mxu0 %v1149
    %1239 = vmatpush.msra.mxu0 %v1147
    %1240 = vmatpush.msra.mxu0 %v1145
    %1241 = vmatpush.msra.mxu0 %v1143
    %1242 = vmatpush.msra.mxu0 %v1141
    %1243 = vmatpush.msra.mxu0 %v1139
    %1244 = vmatpush.msra.mxu0 %v1137
    %1245 = vmatmul.f32.gmra.mxu0 %v1038
    %v1246 = vpop.f32.mrf.mxu0
    %v1247 = vadd.f32 %v1227, %v1246
    %1248 = vdwg.mxu0
    %1249 = vmatpush.msra.mxu0 %v1072
    %1250 = vmatpush.msra.mxu0 %v1070
    %1251 = vmatpush.msra.mxu0 %v1068
    %1252 = vmatpush.msra.mxu0 %v1066
    %1253 = vmatpush.msra.mxu0 %v1064
    %1254 = vmatpush.msra.mxu0 %v1062
    %1255 = vmatpush.msra.mxu0 %v1060
    %1256 = vmatpush.msra.mxu0 %v1058
    %1257 = vmatpush.msra.mxu0 %v1056
    %1258 = vmatpush.msra.mxu0 %v1054
    %1259 = vmatpush.msra.mxu0 %v1052
    %1260 = vmatpush.msra.mxu0 %v1050
    %1261 = vmatpush.msra.mxu0 %v1048
    %1262 = vmatpush.msra.mxu0 %v1046
    %1263 = vmatpush.msra.mxu0 %v1044
    %1264 = vmatpush.msra.mxu0 %v1042
    %1265 = vmatmul.f32.gmra.mxu0 %v1029
    %v1266 = vpop.f32.mrf.mxu0
    %v1267 = vadd.f32 0.0, %v1266
    %1268 = vdwg.mxu0
    %1269 = vmatpush.msra.mxu0 %v1104
    %1270 = vmatpush.msra.mxu0 %v1102
    %1271 = vmatpush.msra.mxu0 %v1100
    %1272 = vmatpush.msra.mxu0 %v1098
    %1273 = vmatpush.msra.mxu0 %v1096
    %1274 = vmatpush.msra.mxu0 %v1094
    %1275 = vmatpush.msra.mxu0 %v1092
    %1276 = vmatpush.msra.mxu0 %v1090
    %1277 = vmatpush.msra.mxu0 %v1088
    %1278 = vmatpush.msra.mxu0 %v1086
    %1279 = vmatpush.msra.mxu0 %v1084
    %1280 = vmatpush.msra.mxu0 %v1082
    %1281 = vmatpush.msra.mxu0 %v1080
    %1282 = vmatpush.msra.mxu0 %v1078
    %1283 = vmatpush.msra.mxu0 %v1076
    %1284 = vmatpush.msra.mxu0 %v1074
    %1285 = vmatmul.f32.gmra.mxu0 %v1030
    %v1286 = vpop.f32.mrf.mxu0
    %v1287 = vadd.f32 %v1267, %v1286
    %1288 = vdwg.mxu0
    %1289 = vmatpush.msra.mxu0 %v1136
    %1290 = vmatpush.msra.mxu0 %v1134
    %1291 = vmatpush.msra.mxu0 %v1132
    %1292 = vmatpush.msra.mxu0 %v1130
    %1293 = vmatpush.msra.mxu0 %v1128
    %1294 = vmatpush.msra.mxu0 %v1126
    %1295 = vmatpush.msra.mxu0 %v1124
    %1296 = vmatpush.msra.mxu0 %v1122
    %1297 = vmatpush.msra.mxu0 %v1120
    %1298 = vmatpush.msra.mxu0 %v1118
    %1299 = vmatpush.msra.mxu0 %v1116
    %1300 = vmatpush.msra.mxu0 %v1114
    %1301 = vmatpush.msra.mxu0 %v1112
    %1302 = vmatpush.msra.mxu0 %v1110
    %1303 = vmatpush.msra.mxu0 %v1108
    %1304 = vmatpush.msra.mxu0 %v1106
    %1305 = vmatmul.f32.gmra.mxu0 %v1037
    %v1306 = vpop.f32.mrf.mxu0
    %v1307 = vadd.f32 %v1287, %v1306
    %1308 = vdwg.mxu0
    %1309 = vmatpush.msra.mxu0 %v1168
    %1310 = vmatpush.msra.mxu0 %v1166
    %1311 = vmatpush.msra.mxu0 %v1164
    %1312 = vmatpush.msra.mxu0 %v1162
    %1313 = vmatpush.msra.mxu0 %v1160
    %1314 = vmatpush.msra.mxu0 %v1158
    %1315 = vmatpush.msra.mxu0 %v1156
    %1316 = vmatpush.msra.mxu0 %v1154
    %1317 = vmatpush.msra.mxu0 %v1152
    %1318 = vmatpush.msra.mxu0 %v1150
    %1319 = vmatpush.msra.mxu0 %v1148
    %1320 = vmatpush.msra.mxu0 %v1146
    %1321 = vmatpush.msra.mxu0 %v1144
    %1322 = vmatpush.msra.mxu0 %v1142
    %1323 = vmatpush.msra.mxu0 %v1140
    %1324 = vmatpush.msra.mxu0 %v1138
    %1325 = vmatmul.f32.gmra.mxu0 %v1038
    %v1326 = vpop.f32.mrf.mxu0
    %v1327 = vadd.f32 %v1307, %v1326
    %1328 = vdwg.mxu0
    %v1329 = vxor.u32 %v1247, 2147483648
    %v1330 = vxor.u32 %v1327, 2147483648
    %v1331 = vmul.f32 %v1329, 1.442695
    %v1332 = vpow.pop %v1331
    %v1333 = vmul.f32 %v1330, 1.442695
    %v1334 = vpow.pop %v1333
    %v1335 = vadd.f32 %v1332, 1.0
    %v1336 = vadd.f32 %v1334, 1.0
    %v1337 = vrcp.pop %v1335
    %v1338 = vmul.f32 %v1335, %v1337
    %v1339 = vsub.f32 1.0, %v1338
    %v1340 = vmul.f32 %v1337, %v1339
    %v1341 = vadd.f32 %v1337, %v1340
    %vm1342 = vweird.f32 %v1335
    %vm1343 = vweird.f32 %v1337
    %vm1344 = vmor %vm1342, %vm1343
    %v1345 = vsel %vm1344, %v1337, %v1341
    %v1346 = vand.u32 2147483647, %v1335
    %vm1347 = vcmp.eq.f32.partialorder %v1346, 8.507059e+37
    %v1348 = vand.u32 %v1335, 2147483648
    %v1349 = vor.u32 1.1754944e-38, %v1348
    %v1350 = vsel %vm1347, %v1349, %v1345
    %v1351 = vmul.f32 1.0, %v1350
    %v1352 = vrcp.pop %v1336
    %v1353 = vmul.f32 %v1336, %v1352
    %v1354 = vsub.f32 1.0, %v1353
    %v1355 = vmul.f32 %v1352, %v1354
    %v1356 = vadd.f32 %v1352, %v1355
    %vm1357 = vweird.f32 %v1336
    %vm1358 = vweird.f32 %v1352
    %vm1359 = vmor %vm1357, %vm1358
    %v1360 = vsel %vm1359, %v1352, %v1356
    %v1361 = vand.u32 2147483647, %v1336
    %vm1362 = vcmp.eq.f32.partialorder %v1361, 8.507059e+37
    %v1363 = vand.u32 %v1336, 2147483648
    %v1364 = vor.u32 1.1754944e-38, %v1363
    %v1365 = vsel %vm1362, %v1364, %v1360
    %v1366 = vmul.f32 1.0, %v1365
    %v1369 = vrot.slane %v1366, 7
    %vm1370 = vcmask 1040384
    %v1371 = vsel %vm1370, %v1351, %v1369
    %v1372 = vsel %vm183, %v1351, %v1369
    %v1373 = vrot.slane %v1372, 1
    %v1374 = vperm.slane %v1371, 0
    %v1375 = vperm.slane %v1371, 1
    %v1376 = vperm.slane %v1373, 0
    %v1377 = vperm.slane %v1373, 1
    %v1382 = vmul.f32 %v950, %v1374
    %v1383 = vmul.f32 %v951, %v1375
    %v1384 = vmul.f32 %v952, %v1374
    %v1385 = vmul.f32 %v953, %v1375
    %v1386 = vmul.f32 %v954, %v1376
    %v1387 = vmul.f32 %v955, %v1377
    %v1388 = vmul.f32 %v956, %v1376
    %v1389 = vmul.f32 %v957, %v1377
    %1390 = vst [vmem:[#allocation7] sm:$0xff] %v1382
    %1391 = vst [vmem:[#allocation7 + $0x8] sm:$0xff] %v1383
    %1392 = vst [vmem:[#allocation7 + $0x10] sm:$0xff] %v1384
    %1393 = vst [vmem:[#allocation7 + $0x18] sm:$0xff] %v1385
    %1394 = vst [vmem:[#allocation7 + $0x20] sm:$0xff] %v1386
    %1395 = vst [vmem:[#allocation7 + $0x28] sm:$0xff] %v1387
    %1396 = vst [vmem:[#allocation7 + $0x30] sm:$0xff] %v1388
    %1397 = vst [vmem:[#allocation7 + $0x38] sm:$0xff] %v1389
    // Predicated region
    $region26: #{tpu_custom_call.1} parent=1 // pred_check
      _
    $region27: #{tpu_custom_call.1} parent=1 // pred_check_branch
      %1399 = sbr.rel (0) target = $region29
    $region28: #{tpu_custom_call.1} parent=1 // pred_region
      %1401 = vsyncadd [#allocation4], 0
      %s1402 = sshll.u32 [#allocation7], 4
      %s1403 = int_to_ptr.vmem [resolvable:$true] %s1402
      %s1404 = sshll.u32 %s4, 4
      %s1405 = int_to_ptr.hbm [resolvable:$true] %s1404
      %1410 = dma.vmem_to_hbm [thread:$0]  %s1403, 1024, %s1405, [#allocation4], 256, 256, 16
    $region29: #{tpu_custom_call.1} parent=1 // pred_fallthru
      _
    // Predicated region
    $region30: #{tpu_custom_call.1} parent=1 // pred_check
      _
    $region31: #{tpu_custom_call.1} parent=1 // pred_check_branch
      %1412 = sbr.rel (0) target = $region33
    $region32: #{tpu_custom_call.1} parent=1 // pred_region
      %1414 = dma.done [#allocation4], 1024
    $region33: #{tpu_custom_call.1} parent=1 // pred_fallthru
      _
    %1415 = vsyncpa [#allocation3], 1
    %1416 = vsyncpa [#allocation6], 1
    %1417 = vsyncpa [#allocation4], 1

</llo_original>
